<compile_context>
chip_gen: v6e
topology: v6e:2x2x1
jax: 0.10.0
libtpu: 0.0.40
codegen_flags: <defaults>
</compile_context>

<pallas_src>
import jax
import jax.numpy as jnp
from jax.experimental import pallas as pl
from jax.experimental.pallas import tpu as pltpu


def _hsigmoid_kernel(x_ref, o_ref):
    x = x_ref[...]
    # relu6(x + 3) / 6  ==  clip(x + 3, 0, 6) * (1/6)
    o_ref[...] = (jnp.clip(x + 3.0, 0.0, 6.0) * (1.0 / 6.0)).astype(o_ref.dtype)


_LANES = 128
_WIDTH_CANDIDATES = (4096, 2048, 1024, 512, 256, 128)
_TARGET_BLOCK_BYTES = 2 * 1024 * 1024  # ~2 MiB/block/array -> 8 MiB pipelined


def _sublane_multiple(dtype) -> int:
    # Native packing: (8,128) for 32-bit, (16,128) for 16-bit, (32,128) for 8-bit.
    itemsize = jnp.dtype(dtype).itemsize
    if itemsize >= 4:
        return 8
    if itemsize == 2:
        return 16
    return 32


def _pick_width(n: int):
    # Prefer a wide lane-dense slab that still leaves >= 8 rows to tile over;
    # otherwise any width that divides n exactly; else None => pad path.
    for w in _WIDTH_CANDIDATES:
        if n % w == 0 and n // w >= 8:
            return w
    for w in _WIDTH_CANDIDATES:
        if n % w == 0:
            return w
    return None


def _run_2d(x2d: jnp.ndarray, donate: bool) -> jnp.ndarray:
    rows, width = x2d.shape
    dtype = x2d.dtype
    sub = _sublane_multiple(dtype)
    itemsize = jnp.dtype(dtype).itemsize

    if rows <= sub:
        tr = rows  # full-extent block along rows is always legal
    else:
        rows_floor = (rows // sub) * sub
        tr = max(_TARGET_BLOCK_BYTES // (width * itemsize), sub)
        tr = max((tr // sub) * sub, sub)
        tr = min(tr, rows_floor)
        # Keep >= 2 grid steps when there is enough work so both v7x
        # TensorCores get a share of the (parallel) grid axis.
        if tr >= rows and rows >= 2 * sub:
            tr = max(((rows_floor // 2) // sub) * sub, sub)

    grid = (pl.cdiv(rows, tr),)  # partial last block handled by masking

    return pl.pallas_call(
        _hsigmoid_kernel,
        out_shape=jax.ShapeDtypeStruct((rows, width), dtype),
        grid_spec=pltpu.PrefetchScalarGridSpec(
            num_scalar_prefetch=0,
            grid=grid,
            in_specs=[pl.BlockSpec((tr, width), lambda i: (i, 0))],
            out_specs=pl.BlockSpec((tr, width), lambda i: (i, 0)),
        ),
        compiler_params=pltpu.CompilerParams(
            dimension_semantics=("parallel",)),
        input_output_aliases=({0: 0} if donate else {}),
    )(x2d)


def hsigmoid(x: jnp.ndarray, *, donate: bool = False) -> jnp.ndarray:
    """Elementwise hard-sigmoid matching torch: F.relu6(x + 3.0) / 6.0.

    Set donate=True only if the caller no longer needs `x` (halves peak HBM
    footprint; does not change HBM traffic).
    """
    orig_shape = x.shape
    n = x.size
    if n == 0:
        return x

    width = _pick_width(n)
    if width is not None:
        # Aligned fast path: no padding, no extra HBM copies.
        x2d = x.reshape(n // width, width)
        return _run_2d(x2d, donate).reshape(orig_shape)

    # Remainder path: minimal pad up to a multiple of 128 lanes, slice back.
    width = _LANES
    rows = pl.cdiv(n, width)
    pad = rows * width - n
    x2d = jnp.pad(x.reshape(-1), (0, pad)).reshape(rows, width)
    out2d = _run_2d(x2d, donate)
    return out2d.reshape(-1)[:n].reshape(orig_shape)


if __name__ == "__main__":
    key = jax.random.PRNGKey(0)

    # 1) NCHW feature map (aligned fast path, no padding).
    x = jax.random.normal(key, (2, 4, 16, 16), dtype=jnp.float32) * 5.0
    y = hsigmoid(x)
    jax.block_until_ready(y)
    y_ref = jnp.clip(x + 3.0, 0.0, 6.0) / 6.0
    assert y.shape == x.shape and y.dtype == x.dtype
    assert jnp.allclose(y, y_ref, atol=1e-6), "mismatch vs reference (aligned)"

    # 2) Awkward size (pad path + partial last block via cdiv grid).
    key2 = jax.random.PRNGKey(0)
    x2 = jax.random.normal(key2, (3, 5, 7, 11), dtype=jnp.float32) * 5.0
    y2 = hsigmoid(x2)
    jax.block_until_ready(y2)
    y2_ref = jnp.clip(x2 + 3.0, 0.0, 6.0) / 6.0
    assert y2.shape == x2.shape and y2.dtype == x2.dtype
    assert jnp.allclose(y2, y2_ref, atol=1e-6), "mismatch vs reference (padded)"

    print("KERNEL_OK")
</pallas_src>

<mosaic_0001>
module attributes {stable_mosaic.version = 11 : i64} {
  func.func @_hsigmoid_kernel(%arg0: i32, %arg1: memref<8x256xf32, #tpu.memory_space<vmem>>, %arg2: memref<8x256xf32, #tpu.memory_space<vmem>>) attributes {dimension_semantics = [#tpu.dimension_semantics<parallel>], iteration_bounds = array<i64: 1>, scalar_prefetch = 0 : i64, scratch_operands = 0 : i64, tpu.core_type = #tpu.core_type<tc>, window_params = [{transform_indices = @transform_0, window_bounds = array<i64: 8, 256>}, {transform_indices = @transform_1, window_bounds = array<i64: 8, 256>}]} {
    %c0 = arith.constant 0 : index
    %c0_0 = arith.constant 0 : index
    %0 = vector.load %arg1[%c0, %c0_0] : memref<8x256xf32, #tpu.memory_space<vmem>>, vector<8x256xf32>
    %cst = arith.constant 3.000000e+00 : f32
    %1 = vector.broadcast %cst : f32 to vector<8x256xf32>
    %2 = arith.addf %0, %1 : vector<8x256xf32>
    %cst_1 = arith.constant 0.000000e+00 : f32
    %cst_2 = arith.constant 6.000000e+00 : f32
    %3 = vector.broadcast %cst_1 : f32 to vector<8x256xf32>
    %4 = arith.maximumf %3, %2 : vector<8x256xf32>
    %5 = vector.broadcast %cst_2 : f32 to vector<8x256xf32>
    %6 = arith.minimumf %5, %4 : vector<8x256xf32>
    %cst_3 = arith.constant 0.166666672 : f32
    %7 = vector.broadcast %cst_3 : f32 to vector<8x256xf32>
    %8 = arith.mulf %6, %7 : vector<8x256xf32>
    %c0_4 = arith.constant 0 : index
    %c0_5 = arith.constant 0 : index
    %9 = vector.load %arg2[%c0_4, %c0_5] : memref<8x256xf32, #tpu.memory_space<vmem>>, vector<8x256xf32>
    tpu.vector_store %arg2[%c0_4, %c0_5], %8 {strides = array<i32>} : memref<8x256xf32, #tpu.memory_space<vmem>>, vector<8x256xf32>,
    return
  }
  func.func @transform_0(%arg0: i32) -> (i32, i32) {
    %c0_i32 = arith.constant 0 : i32
    %c0_i32_0 = arith.constant 0 : i32
    return %arg0, %c0_i32 : i32, i32
  }
  func.func @transform_1(%arg0: i32) -> (i32, i32) {
    %c0_i32 = arith.constant 0 : i32
    %c0_i32_0 = arith.constant 0 : i32
    return %arg0, %c0_i32 : i32, i32
  }
}

</mosaic_0001>

<llo_original>
// kernel: tpu_custom_call.1
$region0: #{tpu_custom_call.1}
  #allocation0 [shape = 'u32[]', space=smem, size = 0x4, offset = 0x4, fixed_abs, tag = 'smem constant byte address 0x4 - core index']
  #allocation1 [shape = 'u32[144,128]{1,0:T(1,128)}', space=vmem, size = 0x12000, scoped, tag = 'internal scratch']
  %s0 = inlined_call_operand.hbm [shape: f32[8,256], index: 0, kind: input, shape index: {}]
  %s1 = inlined_call_operand.hbm [shape: f32[8,256], index: 1, kind: output, shape index: {}]
  %s2 = sld [smem:[#allocation0]]
  $region18: #{tpu_custom_call.1} parent=0
    _
  %s4 = ssub.s32 1, %s2
  %s5 = scalar_select 0, %s4, %s2
  $region1: #{tpu_custom_call.1} parent=0
    #allocation2 [shape = 'u8[8192]{0}', space=vmem, size = 0x2000, scoped, tag = 'input window, operand 0, single buffered']
    #allocation3 [shape = 's32[1]{0}', space=sflag, size = 0x4, scoped, tag = 'scoped memory for tpu_custom_call.1']
    #allocation4 [shape = 's32[1]{0}', space=sflag, size = 0x4, scoped, tag = 'scoped memory for tpu_custom_call.1']
    #allocation5 [shape = 'u8[8192]{0}', space=vmem, size = 0x2000, scoped, tag = 'output window, operand 0, single buffered']
    %6 = vsyncpa [#allocation3], 0
    %7 = vsyncpa [#allocation4], 0
    // Predicated region
    $region2: #{tpu_custom_call.1} parent=1 // pred_check
      _
    $region3: #{tpu_custom_call.1} parent=1 // pred_check_branch
      %9 = sbr.rel (0) target = $region5
    $region4: #{tpu_custom_call.1} parent=1 // pred_region
      %s11 = ssub.s32 256, 256
      %12 = vsyncadd [#allocation3], %s11
      %s14 = sshll.u32 [#allocation2], 4
      %s15 = int_to_ptr.vmem [resolvable:$true] %s14
      %17 = dma.hbm_to_vmem [thread:$0]  %s0, 256, %s15, [#allocation3]
    $region5: #{tpu_custom_call.1} parent=1 // pred_fallthru
      _
    // Predicated region
    $region6: #{tpu_custom_call.1} parent=1 // pred_check
      _
    $region7: #{tpu_custom_call.1} parent=1 // pred_check_branch
      %19 = sbr.rel (0) target = $region9
    $region8: #{tpu_custom_call.1} parent=1 // pred_region
      %20 = dma.done [#allocation3], 256
    $region9: #{tpu_custom_call.1} parent=1 // pred_fallthru
      _
    %v21 = vld [vmem:[#allocation2] sm:$0xff]
    %v22 = vld [vmem:[#allocation2 + $0x8] sm:$0xff]
    %v23 = vadd.f32 %v21, 3.0
    %v24 = vadd.f32 %v22, 3.0
    %v25 = vmax.f32 %v23, 0.0
    %v26 = vmax.f32 %v24, 0.0
    %v27 = vmin.f32 %v25, 6.0
    %v28 = vmin.f32 %v26, 6.0
    %v29 = vmul.f32 %v27, 0.16666667
    %v30 = vmul.f32 %v28, 0.16666667
    %31 = vst [vmem:[#allocation5] sm:$0xff] %v29
    %32 = vst [vmem:[#allocation5 + $0x8] sm:$0xff] %v30
    // Predicated region
    $region10: #{tpu_custom_call.1} parent=1 // pred_check
      _
    $region11: #{tpu_custom_call.1} parent=1 // pred_check_branch
      %34 = sbr.rel (0) target = $region13
    $region12: #{tpu_custom_call.1} parent=1 // pred_region
      %s36 = ssub.s32 256, 256
      %37 = vsyncadd [#allocation4], %s36
      %s39 = sshll.u32 [#allocation5], 4
      %s40 = int_to_ptr.vmem [resolvable:$true] %s39
      %42 = dma.vmem_to_hbm [thread:$0]  %s40, 256, %s1, [#allocation4]
    $region13: #{tpu_custom_call.1} parent=1 // pred_fallthru
      _
    // Predicated region
    $region14: #{tpu_custom_call.1} parent=1 // pred_check
      _
    $region15: #{tpu_custom_call.1} parent=1 // pred_check_branch
      %44 = sbr.rel (0) target = $region17
    $region16: #{tpu_custom_call.1} parent=1 // pred_region
      %45 = dma.done [#allocation4], 256
    $region17: #{tpu_custom_call.1} parent=1 // pred_fallthru
      _
    %46 = vsyncpa [#allocation3], 1
    %47 = vsyncpa [#allocation4], 1

</llo_original>
